<compile_context>
chip_gen: v6e
topology: v6e:2x2x1
jax: 0.10.0
libtpu: 0.0.40
codegen_flags: <defaults>
</compile_context>

<pallas_src>
import jax
import jax.numpy as jnp
from jax.experimental import pallas as pl
from jax.experimental.pallas import tpu as pltpu


# ----------------------------------------------------------------------------
# Optional Pallas path (only used when a standalone Mosaic op is required).
# ----------------------------------------------------------------------------
def _scalar_kernel(c_ref, o_ref):
    # Pass-through of the scalar parameter.  Output is aliased to the input;
    # the write is kept so the body is correct even if XLA declines to alias.
    o_ref[0] = c_ref[0]


def _scalar_forward_pallas_impl(constant: jax.Array) -> jax.Array:
    # Glue: 0-d param -> (1,) so it can live on the scalar (SMEM) path.
    c1d = constant.reshape(1)
    out = pl.pallas_call(
        _scalar_kernel,
        out_shape=jax.ShapeDtypeStruct((1,), c1d.dtype),
        in_specs=[pl.BlockSpec(memory_space=pltpu.MemorySpace.SMEM)],
        out_specs=pl.BlockSpec(memory_space=pltpu.MemorySpace.SMEM),
        input_output_aliases={0: 0},  # no extra output buffer / writeback
    )(c1d)
    return out.reshape(())  # back to 0-d, matching the torch Parameter


@jax.custom_vjp
def scalar_forward_pallas(constant: jax.Array) -> jax.Array:
    return _scalar_forward_pallas_impl(constant)


def _scalar_fwd(constant):
    return _scalar_forward_pallas_impl(constant), None


def _scalar_bwd(_, g):
    return (g,)


scalar_forward_pallas.defvjp(_scalar_fwd, _scalar_bwd)

# jit collapses the reshape glue + pallas_call into one dispatch.
_scalar_forward_pallas_jit = jax.jit(scalar_forward_pallas)


# ----------------------------------------------------------------------------
# Module
# ----------------------------------------------------------------------------
class Scalar:
    """JAX port of the PyTorch Scalar module.

    forward() returns the stored parameter.  Default path is pure JAX
    (zero device dispatches); `use_pallas=True` routes through the minimal
    Mosaic identity kernel above.
    """

    def __init__(self, init_value: float):
        # Same as torch.tensor(init_value, dtype=torch.float32).
        self.constant = jnp.asarray(init_value, dtype=jnp.float32)

    def __call__(self, use_pallas: bool = False) -> jax.Array:
        if use_pallas:
            return _scalar_forward_pallas_jit(self.constant)
        # Fast path (review recommendation #1/#3): return the parameter
        # directly — no custom call, no fusion barrier, constant-foldable.
        return self.constant


if __name__ == "__main__":
    # Deterministic init value derived from PRNGKey(0).
    key = jax.random.PRNGKey(0)
    init_value = float(jax.random.uniform(key, (), minval=-1.0, maxval=1.0))
    expected = jnp.asarray(init_value, dtype=jnp.float32)

    module = Scalar(init_value)

    # Default (pure-JAX) forward: exact identity, zero dispatch.
    result = jax.block_until_ready(module())
    assert result.shape == ()
    assert result.dtype == jnp.float32
    assert jnp.allclose(result, expected)

    # Pallas path (mandated-kernel case): same semantics.
    result_pallas = jax.block_until_ready(module(use_pallas=True))
    assert result_pallas.shape == ()
    assert result_pallas.dtype == jnp.float32
    assert jnp.allclose(result_pallas, expected)

    # Gradient through the Pallas op is identity (learnable-parameter semantics).
    grad = jax.block_until_ready(jax.grad(scalar_forward_pallas)(module.constant))
    assert jnp.allclose(grad, jnp.float32(1.0))

    print("KERNEL_OK")
</pallas_src>

<mosaic_0001>
module attributes {stable_mosaic.version = 11 : i64} {
  func.func @_scalar_kernel(%arg0: memref<1xf32, #tpu.memory_space<smem>>, %arg1: memref<1xf32, #tpu.memory_space<smem>>) attributes {dimension_semantics = [], scalar_prefetch = 0 : i64, scratch_operands = 0 : i64, tpu.core_type = #tpu.core_type<tc>} {
    %c0 = arith.constant 0 : index
    %0 = memref.load %arg0[%c0] : memref<1xf32, #tpu.memory_space<smem>>
    %c0_0 = arith.constant 0 : index
    %1 = memref.load %arg1[%c0_0] : memref<1xf32, #tpu.memory_space<smem>>
    memref.store %0, %arg1[%c0_0] : memref<1xf32, #tpu.memory_space<smem>>
    return
  }
}

</mosaic_0001>

<llo_original>
// kernel: scalar_forward_pallas.1
$region0: #{scalar_forward_pallas.1}
  #allocation0 [shape = 'u32[]', space=smem, size = 0x4, offset = 0x4, fixed_abs, tag = 'smem constant byte address 0x4 - core index']
  #allocation1 [shape = 'u32[144,128]{1,0:T(1,128)}', space=vmem, size = 0x12000, scoped, tag = 'internal scratch']
  #allocation2 [shape = 'f32[1]{0:T(128)S(6)}', space=smem, size = 0x200, scoped, tag = 'scoped memory for scalar_forward_pallas.1']
  %s0 = inlined_call_operand.<no memory space> [shape: f32[1], index: 0, kind: input, shape index: {}, may-alias: {0,1}]
  %s1 = inlined_call_operand.hbm [shape: f32[1], index: 1, kind: output, shape index: {}, may-alias: {0,1}]
  %s2 = sld [smem:[#allocation0]]
  $region14: #{scalar_forward_pallas.1} parent=0
    _
  %s4 = ssub.s32 1, %s2
  %s5 = scalar_select 0, %s4, %s2
  %6 = sst [smem:[#allocation2]] %s0
  $region1: #{scalar_forward_pallas.1} parent=0
    #allocation3 [shape = 'u8[512]{0}', space=smem, size = 0x200, scoped, tag = 'output window, operand 0, single buffered']
    #allocation4 [shape = 's32[1]{0}', space=sflag, size = 0x4, scoped, tag = 'scoped memory for scalar_forward_pallas.1']
    %7 = vsyncpa [#allocation4], 0
    // Predicated region
    $region2: #{scalar_forward_pallas.1} parent=1 // pred_check
      _
    $region3: #{scalar_forward_pallas.1} parent=1 // pred_check_branch
      %9 = sbr.rel (0) target = $region5
    $region4: #{scalar_forward_pallas.1} parent=1 // pred_region
      _
    $region5: #{scalar_forward_pallas.1} parent=1 // pred_fallthru
      _
    %s10 = sld [smem:[#allocation2]]
    %s11 = scalar_lea.smem [#allocation3], 0
    %12 = sst [smem:[%s11]] %s10
    // Predicated region
    $region6: #{scalar_forward_pallas.1} parent=1 // pred_check
      _
    $region7: #{scalar_forward_pallas.1} parent=1 // pred_check_branch
      %14 = sbr.rel (0) target = $region9
    $region8: #{scalar_forward_pallas.1} parent=1 // pred_region
      %s16 = ssub.s32 16, 16
      %17 = vsyncadd [#allocation4], %s16
      %20 = dma.smem_to_hbm [#allocation3], 16, %s1, [#allocation4]
    $region9: #{scalar_forward_pallas.1} parent=1 // pred_fallthru
      _
    // Predicated region
    $region10: #{scalar_forward_pallas.1} parent=1 // pred_check
      _
    $region11: #{scalar_forward_pallas.1} parent=1 // pred_check_branch
      %22 = sbr.rel (0) target = $region13
    $region12: #{scalar_forward_pallas.1} parent=1 // pred_region
      %23 = dma.done [#allocation4], 16
    $region13: #{scalar_forward_pallas.1} parent=1 // pred_fallthru
      _
    %24 = sfence
    %25 = vsyncpa [#allocation4], 1

</llo_original>
